<compile_context>
chip_gen: v6e
topology: v6e:2x2x1
jax: 0.10.0
libtpu: 0.0.40
codegen_flags: <defaults>
</compile_context>

<pallas_src>
import jax
import jax.numpy as jnp
from jax.experimental import pallas as pl
from jax.experimental.pallas import tpu as pltpu


def _pick_tile(total, n_outer, bytes_per_unit, *, unit=8, max_bytes=4 << 20,
               min_steps=8):
    """Pick a tile size along a dim of length `total`.

    Candidates are divisors of `total` that are a multiple of `unit` (clean
    sublane/lane alignment) or the full dim.  Among candidates fitting the
    VMEM byte budget, prefer the largest one that still leaves >= `min_steps`
    total grid steps (n_outer * total/tile) so both v7x TensorCores get work
    and the pipeline has blocks to prefetch; otherwise take the largest
    fitting tile.
    TODO(synk): a cdiv grid with a masked tail would decouple tiling from the
    factorization of `total` entirely.
    """
    cands = [d for d in range(1, total + 1)
             if total % d == 0 and (d % unit == 0 or d == total)]
    fitting = [d for d in cands if d * bytes_per_unit <= max_bytes] or [min(cands)]
    good = [d for d in fitting if n_outer * (total // d) >= min_steps]
    return max(good) if good else max(fitting)


# ----------------------------------------------------------------------------
# Pass 1: one streaming read of NCHW x -> bf16 2x2 tap sums + per-row stats
# ----------------------------------------------------------------------------
def pool_stats_kernel(x_ref, p_ref, tap_ref, s_ref, ss_ref):
    # x_ref:   (1, tr, 2W)  collapsed (channel, row-pair) rows; the two image
    #                       rows of each vertical pair are folded into lanes.
    # p_ref:   (2W, Wp)     constant 0/1 pooling matrix (bf16): column wp sums
    #                       the 4 taps of output pixel wp.
    # tap_ref: (1, tr, Wp)  2x2 tap sums (un-normalized, pre-scale), bf16.
    # s_ref:   (1, tr, 1)   per-row partial sum of x      (f32)
    # ss_ref:  (1, tr, 1)   per-row partial sum of x^2    (f32, exact path)
    x = x_ref[0].astype(jnp.float32)
    ss_ref[0] = jnp.sum(x * x, axis=1, keepdims=True)            # VPU + lane reduce
    taps = jnp.dot(x.astype(jnp.bfloat16), p_ref[...],           # pooling on the MXU
                   preferred_element_type=jnp.float32)
    # Sum of the pooled taps == sum of x (cheaper reduction, per review).
    s_ref[0] = jnp.sum(taps, axis=1, keepdims=True)
    tap_ref[0] = taps.astype(tap_ref.dtype)


# ----------------------------------------------------------------------------
# Pass 2: folded-BN 1x1 conv on pooled taps (bf16 MXU matmul + f32 bias)
# ----------------------------------------------------------------------------
def conv_kernel(tap_ref, w_ref, b_ref, o_ref):
    # tap_ref: (1, Cin, tm) bf16 pooled tap sums (spatial positions on lanes)
    # w_ref:   (Cout, Cin)  bf16 folded weight W' = W * (gamma/sqrt(var+eps)) / 4
    # b_ref:   (Cout, 1)    f32 folded bias    b  = W @ (beta - mean*gamma/sqrt(var+eps))
    # o_ref:   (1, Cout, tm) activation dtype, NCHW-flat
    y = jnp.dot(w_ref[...], tap_ref[0], preferred_element_type=jnp.float32)
    o_ref[0] = (y + b_ref[...]).astype(o_ref.dtype)


def transition_forward(x_nchw, conv_w, gamma, beta, eps=1e-5):
    n, cin, h, w = x_nchw.shape
    cout = conv_w.shape[0]
    # TODO(synk): odd spatial dims (AvgPool2d truncation) are not handled.
    assert h % 2 == 0 and w % 2 == 0, "Transition assumes even spatial dims"
    hp, wp = h // 2, w // 2
    m = hp * wp
    w2 = 2 * w
    rows = cin * hp                       # collapsed (channel, row-pair) dim
    itemsize = x_nchw.dtype.itemsize

    # Free bitcast: NCHW -> (N, Cin*Hp, 2W).  No HBM relayout of x.
    x_r = x_nchw.reshape(n, rows, w2)

    # 0/1 pooling matrix: lane j of a collapsed row is column (j % W) of one of
    # the two image rows; output pixel wp sums lanes with (j % W) // 2 == wp.
    col = jnp.arange(w2) % w
    pool_mat = (col[:, None] // 2 == jnp.arange(wp)[None, :]).astype(jnp.bfloat16)

    # ---- pass 1 -------------------------------------------------------------
    row_bytes = max(w2, 128) * itemsize + 128 * 2 + 8   # x + tap + stats (lane-padded)
    tr = _pick_tile(rows, n, row_bytes, unit=8, max_bytes=4 << 20, min_steps=8)
    n_rt = rows // tr

    tap, s_part, ss_part = pl.pallas_call(
        pool_stats_kernel,
        out_shape=(jax.ShapeDtypeStruct((n, rows, wp), jnp.bfloat16),
                   jax.ShapeDtypeStruct((n, rows, 1), jnp.float32),
                   jax.ShapeDtypeStruct((n, rows, 1), jnp.float32)),
        grid_spec=pltpu.PrefetchScalarGridSpec(
            num_scalar_prefetch=0,
            grid=(n, n_rt),
            in_specs=[pl.BlockSpec((1, tr, w2), lambda i, j: (i, j, 0)),
                      pl.BlockSpec((w2, wp), lambda i, j: (0, 0))],
            out_specs=(pl.BlockSpec((1, tr, wp), lambda i, j: (i, j, 0)),
                       pl.BlockSpec((1, tr, 1), lambda i, j: (i, j, 0)),
                       pl.BlockSpec((1, tr, 1), lambda i, j: (i, j, 0)))),
        compiler_params=pltpu.CompilerParams(
            dimension_semantics=("parallel", "parallel"),
            vmem_limit_bytes=32 * 1024 * 1024),
    )(x_r, pool_mat)

    # ---- BN statistics + affine folding (tiny, XLA) -------------------------
    cnt = jnp.float32(n * h * w)
    s = jnp.sum(s_part.reshape(n, cin, hp), axis=(0, 2))
    ss = jnp.sum(ss_part.reshape(n, cin, hp), axis=(0, 2))
    mean = s / cnt
    # Biased (training-mode) variance.  TODO(synk): E[x^2]-E[x]^2 is
    # cancellation-prone when |mean| >> std; a shifted accumulation would be
    # more robust for production BN.  Clamp keeps the sqrt well defined.
    var = jnp.maximum(ss / cnt - mean * mean, 0.0)
    inv = gamma.astype(jnp.float32) / jnp.sqrt(var + eps)
    w_mat = conv_w.reshape(cout, cin).astype(jnp.float32)
    # Fold BN scale AND the avg-pool 1/4 factor into the conv weight; fold the
    # BN shift through the conv into a per-output-channel bias.
    w_fold = (w_mat * (0.25 * inv)[None, :]).astype(jnp.bfloat16)
    bias = (w_mat @ (beta.astype(jnp.float32) - mean * inv)).reshape(cout, 1)

    # ---- pass 2 -------------------------------------------------------------
    tap_flat = tap.reshape(n, cin, m)      # free bitcast: (N, Cin*Hp, Wp) -> (N, Cin, M)
    col_bytes = cin * 2 + cout * itemsize
    tm = _pick_tile(m, n, col_bytes, unit=128, max_bytes=4 << 20, min_steps=8)
    n_mt = m // tm

    out = pl.pallas_call(
        conv_kernel,
        out_shape=jax.ShapeDtypeStruct((n, cout, m), x_nchw.dtype),
        grid_spec=pltpu.PrefetchScalarGridSpec(
            num_scalar_prefetch=0,
            grid=(n, n_mt),
            in_specs=[pl.BlockSpec((1, cin, tm), lambda i, j: (i, 0, j)),
                      # NOTE(v7x): for very large Cin*Cout this resident weight
                      # block could be single-buffered (pipeline_mode=
                      # pl.Buffered(1)) to reclaim VMEM for a larger tm tile;
                      # at transition-layer sizes (<1 MiB) the default double
                      # buffer is harmless, so it is left at the default here.
                      pl.BlockSpec((cout, cin), lambda i, j: (0, 0)),
                      pl.BlockSpec((cout, 1), lambda i, j: (0, 0))],
            out_specs=pl.BlockSpec((1, cout, tm), lambda i, j: (i, 0, j))),
        compiler_params=pltpu.CompilerParams(
            dimension_semantics=("parallel", "parallel"),
            vmem_limit_bytes=32 * 1024 * 1024),
    )(tap_flat, w_fold, bias)

    # Free bitcast back to NCHW: (N, Cout, M) -> (N, Cout, Hp, Wp).
    return out.reshape(n, cout, hp, wp)


def _reference(x, conv_w, gamma, beta, eps=1e-5):
    # Pure-JAX f32 reference of the PyTorch forward (training-mode BN).
    mean = jnp.mean(x, axis=(0, 2, 3), keepdims=True)
    var = jnp.mean((x - mean) ** 2, axis=(0, 2, 3), keepdims=True)
    xn = (x - mean) / jnp.sqrt(var + eps)
    xn = xn * gamma.reshape(1, -1, 1, 1) + beta.reshape(1, -1, 1, 1)
    y = jnp.einsum('nchw,oc->nohw', xn, conv_w.reshape(conv_w.shape[0], -1))
    n, c, hh, ww = y.shape
    return y.reshape(n, c, hh // 2, 2, ww // 2, 2).mean(axis=(3, 5))


if __name__ == "__main__":
    N, Cin, H, W = 2, 4, 16, 16
    Cout = 8

    key = jax.random.PRNGKey(0)
    kx, kw, kg, kb = jax.random.split(key, 4)

    x = jax.random.normal(kx, (N, Cin, H, W), dtype=jnp.float32)
    conv_w = jax.random.normal(kw, (Cout, Cin, 1, 1), dtype=jnp.float32) * 0.1
    gamma = jax.random.normal(kg, (Cin,), dtype=jnp.float32) * 0.1 + 1.0
    beta = jax.random.normal(kb, (Cin,), dtype=jnp.float32) * 0.1

    out = jax.jit(transition_forward)(x, conv_w, gamma, beta)
    out = jax.block_until_ready(out)

    ref = _reference(x, conv_w, gamma, beta)
    assert out.shape == (N, Cout, H // 2, W // 2), out.shape
    # Tolerance accounts for bf16 tap storage and bf16 MXU operands (f32
    # accumulation); the BN statistics path stays in f32.
    err = float(jnp.max(jnp.abs(out - ref)))
    assert jnp.allclose(out, ref, rtol=2e-2, atol=2e-2), err

    print("KERNEL_OK")
</pallas_src>

<mosaic_0001>
module attributes {stable_mosaic.version = 11 : i64} {
  func.func @pool_stats_kernel(%arg0: i32, %arg1: i32, %arg2: memref<1x8x32xf32, #tpu.memory_space<vmem>>, %arg3: memref<32x8xbf16, #tpu.memory_space<vmem>>, %arg4: memref<1x8x8xbf16, #tpu.memory_space<vmem>>, %arg5: memref<1x8x1xf32, #tpu.memory_space<vmem>>, %arg6: memref<1x8x1xf32, #tpu.memory_space<vmem>>) attributes {dimension_semantics = [#tpu.dimension_semantics<parallel>, #tpu.dimension_semantics<parallel>], iteration_bounds = array<i64: 2, 4>, scalar_prefetch = 0 : i64, scratch_operands = 0 : i64, tpu.core_type = #tpu.core_type<tc>, window_params = [{transform_indices = @transform_0, window_bounds = array<i64: 1, 8, 32>}, {pipeline_mode = #tpu.pipeline_mode<synchronous>, transform_indices = @transform_1, window_bounds = array<i64: 32, 8>}, {transform_indices = @transform_2, window_bounds = array<i64: 1, 8, 8>}, {transform_indices = @transform_3, window_bounds = array<i64: 1, 8, 1>}, {transform_indices = @transform_4, window_bounds = array<i64: 1, 8, 1>}]} {
    %c0 = arith.constant 0 : index
    %c0_0 = arith.constant 0 : index
    %c0_1 = arith.constant 0 : index
    %0 = vector.load %arg2[%c0, %c0_0, %c0_1] : memref<1x8x32xf32, #tpu.memory_space<vmem>>, vector<1x8x32xf32>
    %1 = vector.shape_cast %0 : vector<1x8x32xf32> to vector<8x32xf32>
    %2 = arith.mulf %1, %1 : vector<8x32xf32>
    %cst = arith.constant dense<0.000000e+00> : vector<8xf32>
    %3 = vector.multi_reduction <add>, %2, %cst [1] : vector<8x32xf32> to vector<8xf32>
    %4 = vector.shape_cast %3 : vector<8xf32> to vector<8x1xf32>
    %c0_2 = arith.constant 0 : index
    %c0_3 = arith.constant 0 : index
    %c0_4 = arith.constant 0 : index
    %5 = vector.load %arg6[%c0_2, %c0_3, %c0_4] : memref<1x8x1xf32, #tpu.memory_space<vmem>>, vector<1x8x1xf32>
    %6 = vector.shape_cast %5 : vector<1x8x1xf32> to vector<8x1xf32>
    %7 = vector.shape_cast %4 : vector<8x1xf32> to vector<1x8x1xf32>
    tpu.vector_store %arg6[%c0_2, %c0_3, %c0_4], %7 {strides = array<i32>} : memref<1x8x1xf32, #tpu.memory_space<vmem>>, vector<1x8x1xf32>,
    %8 = arith.truncf %1 : vector<8x32xf32> to vector<8x32xbf16>
    %c0_5 = arith.constant 0 : index
    %c0_6 = arith.constant 0 : index
    %9 = vector.load %arg3[%c0_5, %c0_6] : memref<32x8xbf16, #tpu.memory_space<vmem>>, vector<32x8xbf16>
    %cst_7 = arith.constant dense<0.000000e+00> : vector<8x8xf32>
    %10 = tpu.matmul %8, %9, %cst_7 {dimension_numbers = #tpu.dot_dimension_numbers<[1], [0], [0], [1], [0, 0, 1, 1], [], []>} : vector<8x32xbf16>, vector<32x8xbf16>, vector<8x8xf32> -> vector<8x8xf32>
    %cst_8 = arith.constant dense<0.000000e+00> : vector<8xf32>
    %11 = vector.multi_reduction <add>, %10, %cst_8 [1] : vector<8x8xf32> to vector<8xf32>
    %12 = vector.shape_cast %11 : vector<8xf32> to vector<8x1xf32>
    %c0_9 = arith.constant 0 : index
    %c0_10 = arith.constant 0 : index
    %c0_11 = arith.constant 0 : index
    %13 = vector.load %arg5[%c0_9, %c0_10, %c0_11] : memref<1x8x1xf32, #tpu.memory_space<vmem>>, vector<1x8x1xf32>
    %14 = vector.shape_cast %13 : vector<1x8x1xf32> to vector<8x1xf32>
    %15 = vector.shape_cast %12 : vector<8x1xf32> to vector<1x8x1xf32>
    tpu.vector_store %arg5[%c0_9, %c0_10, %c0_11], %15 {strides = array<i32>} : memref<1x8x1xf32, #tpu.memory_space<vmem>>, vector<1x8x1xf32>,
    %16 = arith.truncf %10 : vector<8x8xf32> to vector<8x8xbf16>
    %c0_12 = arith.constant 0 : index
    %c0_13 = arith.constant 0 : index
    %c0_14 = arith.constant 0 : index
    %17 = vector.load %arg4[%c0_12, %c0_13, %c0_14] : memref<1x8x8xbf16, #tpu.memory_space<vmem>>, vector<1x8x8xbf16>
    %18 = vector.shape_cast %17 : vector<1x8x8xbf16> to vector<8x8xbf16>
    %19 = vector.shape_cast %16 : vector<8x8xbf16> to vector<1x8x8xbf16>
    tpu.vector_store %arg4[%c0_12, %c0_13, %c0_14], %19 {strides = array<i32>} : memref<1x8x8xbf16, #tpu.memory_space<vmem>>, vector<1x8x8xbf16>,
    return
  }
  func.func @transform_0(%arg0: i32, %arg1: i32) -> (i32, i32, i32) {
    %c0_i32 = arith.constant 0 : i32
    %c0_i32_0 = arith.constant 0 : i32
    return %arg0, %arg1, %c0_i32 : i32, i32, i32
  }
  func.func @transform_1(%arg0: i32, %arg1: i32) -> (i32, i32) {
    %c0_i32 = arith.constant 0 : i32
    %c0_i32_0 = arith.constant 0 : i32
    %c0_i32_1 = arith.constant 0 : i32
    return %c0_i32, %c0_i32_0 : i32, i32
  }
  func.func @transform_2(%arg0: i32, %arg1: i32) -> (i32, i32, i32) {
    %c0_i32 = arith.constant 0 : i32
    %c0_i32_0 = arith.constant 0 : i32
    return %arg0, %arg1, %c0_i32 : i32, i32, i32
  }
  func.func @transform_3(%arg0: i32, %arg1: i32) -> (i32, i32, i32) {
    %c0_i32 = arith.constant 0 : i32
    %c0_i32_0 = arith.constant 0 : i32
    return %arg0, %arg1, %c0_i32 : i32, i32, i32
  }
  func.func @transform_4(%arg0: i32, %arg1: i32) -> (i32, i32, i32) {
    %c0_i32 = arith.constant 0 : i32
    %c0_i32_0 = arith.constant 0 : i32
    return %arg0, %arg1, %c0_i32 : i32, i32, i32
  }
}

module attributes {stable_mosaic.version = 11 : i64} {
  func.func @conv_kernel(%arg0: i32, %arg1: i32, %arg2: memref<1x4x64xbf16, #tpu.memory_space<vmem>>, %arg3: memref<8x4xbf16, #tpu.memory_space<vmem>>, %arg4: memref<8x1xf32, #tpu.memory_space<vmem>>, %arg5: memref<1x8x64xf32, #tpu.memory_space<vmem>>) attributes {dimension_semantics = [#tpu.dimension_semantics<parallel>, #tpu.dimension_semantics<parallel>], iteration_bounds = array<i64: 2, 1>, scalar_prefetch = 0 : i64, scratch_operands = 0 : i64, tpu.core_type = #tpu.core_type<tc>, window_params = [{transform_indices = @transform_0, window_bounds = array<i64: 1, 4, 64>}, {pipeline_mode = #tpu.pipeline_mode<synchronous>, transform_indices = @transform_1, window_bounds = array<i64: 8, 4>}, {pipeline_mode = #tpu.pipeline_mode<synchronous>, transform_indices = @transform_2, window_bounds = array<i64: 8, 1>}, {transform_indices = @transform_3, window_bounds = array<i64: 1, 8, 64>}]} {
    %c0 = arith.constant 0 : index
    %c0_0 = arith.constant 0 : index
    %0 = vector.load %arg3[%c0, %c0_0] : memref<8x4xbf16, #tpu.memory_space<vmem>>, vector<8x4xbf16>
    %c0_1 = arith.constant 0 : index
    %c0_2 = arith.constant 0 : index
    %c0_3 = arith.constant 0 : index
    %1 = vector.load %arg2[%c0_1, %c0_2, %c0_3] : memref<1x4x64xbf16, #tpu.memory_space<vmem>>, vector<1x4x64xbf16>
    %2 = vector.shape_cast %1 : vector<1x4x64xbf16> to vector<4x64xbf16>
    %cst = arith.constant dense<0.000000e+00> : vector<8x64xf32>
    %3 = tpu.matmul %0, %2, %cst {dimension_numbers = #tpu.dot_dimension_numbers<[1], [0], [0], [1], [0, 0, 1, 1], [], []>} : vector<8x4xbf16>, vector<4x64xbf16>, vector<8x64xf32> -> vector<8x64xf32>
    %c0_4 = arith.constant 0 : index
    %c0_5 = arith.constant 0 : index
    %4 = vector.load %arg4[%c0_4, %c0_5] : memref<8x1xf32, #tpu.memory_space<vmem>>, vector<8x1xf32>
    %5 = vector.broadcast %4 : vector<8x1xf32> to vector<8x64xf32>
    %6 = arith.addf %3, %5 : vector<8x64xf32>
    %c0_6 = arith.constant 0 : index
    %c0_7 = arith.constant 0 : index
    %c0_8 = arith.constant 0 : index
    %7 = vector.load %arg5[%c0_6, %c0_7, %c0_8] : memref<1x8x64xf32, #tpu.memory_space<vmem>>, vector<1x8x64xf32>
    %8 = vector.shape_cast %7 : vector<1x8x64xf32> to vector<8x64xf32>
    %9 = vector.shape_cast %6 : vector<8x64xf32> to vector<1x8x64xf32>
    tpu.vector_store %arg5[%c0_6, %c0_7, %c0_8], %9 {strides = array<i32>} : memref<1x8x64xf32, #tpu.memory_space<vmem>>, vector<1x8x64xf32>,
    return
  }
  func.func @transform_0(%arg0: i32, %arg1: i32) -> (i32, i32, i32) {
    %c0_i32 = arith.constant 0 : i32
    %c0_i32_0 = arith.constant 0 : i32
    return %arg0, %c0_i32, %arg1 : i32, i32, i32
  }
  func.func @transform_1(%arg0: i32, %arg1: i32) -> (i32, i32) {
    %c0_i32 = arith.constant 0 : i32
    %c0_i32_0 = arith.constant 0 : i32
    %c0_i32_1 = arith.constant 0 : i32
    return %c0_i32, %c0_i32_0 : i32, i32
  }
  func.func @transform_2(%arg0: i32, %arg1: i32) -> (i32, i32) {
    %c0_i32 = arith.constant 0 : i32
    %c0_i32_0 = arith.constant 0 : i32
    %c0_i32_1 = arith.constant 0 : i32
    return %c0_i32, %c0_i32_0 : i32, i32
  }
  func.func @transform_3(%arg0: i32, %arg1: i32) -> (i32, i32, i32) {
    %c0_i32 = arith.constant 0 : i32
    %c0_i32_0 = arith.constant 0 : i32
    return %arg0, %c0_i32, %arg1 : i32, i32, i32
  }
}

</mosaic_0001>

<llo_original>
// kernel: transition_forward.2
$region0: #{transition_forward.2}
  #allocation0 [shape = 'u32[]', space=smem, size = 0x4, offset = 0x4, fixed_abs, tag = 'smem constant byte address 0x4 - core index']
  #allocation1 [shape = 'u32[144,128]{1,0:T(1,128)}', space=vmem, size = 0x12000, scoped, tag = 'internal scratch']
  %s0 = inlined_call_operand.vmem [shape: f32[2,32,32], index: 0, kind: input, shape index: {}]
  %s1 = inlined_call_operand.vmem [shape: bf16[32,8], index: 1, kind: input, shape index: {}]
  %s2 = inlined_call_operand.vmem [shape: bf16[2,32,8], index: 2, kind: output, shape index: {0}]
  %s3 = inlined_call_operand.vmem [shape: f32[2,32,1], index: 3, kind: output, shape index: {1}]
  %s4 = inlined_call_operand.vmem [shape: f32[2,32,1], index: 4, kind: output, shape index: {2}]
  %5 = xla_tuple %s2, %s3, %s4
  %s6 = sld [smem:[#allocation0]]
  $region57: #{transition_forward.2} parent=0
    _
  %s8 = ssub.s32 1, %s6
  %s9 = scalar_select 0, %s8, %s6
  loop: start=0, step=1, limit=10
  $region2: #{transition_forward.2} parent=0 // loop_pre_header
    _
  $region3: #{transition_forward.2} parent=0 // loop_header
    %s11 = sphi 0, %s15
    %p12 = scmp.ge.s32.totalorder %s11, 10
    %s18 = sphi 0, %s30
    %s19 = sphi 0, %s26
    %s20 = sphi 0, %s18
    %s21 = sphi 0, %s19
    %s22 = sphi 0, %s20
    %s23 = sphi 0, %s21
    %s35 = sphi 0, %s37
    %s38 = sphi 0, %s35
    %s39 = sphi 0, %s38
    %s55 = sphi 0, %s39
    %s59 = sphi 0, %s59
    %s61 = sphi 0, %s59
    %s62 = sphi 0, %s61
    %s76 = sphi 0, %s62
    %s84 = sphi 0, %s86
    %s87 = sphi 0, %s84
    %s88 = sphi 0, %s87
    %s104 = sphi 0, %s88
    %s112 = sphi 0, %s114
    %s115 = sphi 0, %s112
    %s116 = sphi 0, %s115
    %s132 = sphi 0, %s116
    %s140 = sphi 0, %s142
    %s143 = sphi 0, %s140
    %s144 = sphi 0, %s143
    %s160 = sphi 0, %s144
  $region4: #{transition_forward.2} parent=0 // loop_header_branch
    %14 = sbr.rel (%p12) target = $region8
  $region5: #{transition_forward.2} parent=0 // loop_body
    %s16 = ssub.s32 %s11, 1
    %s17 = ssub.s32 %s11, 2
    %s24 = sadd.s32 1, %s19
    %p25 = scmp.ge.s32.totalorder %s24, 4
    %s26 = scalar_select %p25, 0, %s24
    %s27 = sadd.s32 1, %s18
    %s28 = scalar_select %p25, %s27, %s18
    %p29 = scmp.ge.s32.totalorder %s28, 2
    %s30 = scalar_select %p29, 0, %s28
    %s31 = ssub.s32 %s18, %s30
    %s32 = ssub.s32 %s19, %s26
    %s33 = sor.u32 %s31, %s32
    %p34 = scmp.eq.s32.totalorder %s33, 0
    %s36 = sadd.s32 %s35, 1
    %s37 = scalar_select %p34, %s35, %s36
    %p40 = pneg %p34
    %p41 = scmp.eq.s32.totalorder %s11, 7
    %p42 = por %p40, %p41
    %p43 = scmp.ne.s32.totalorder %s35, %s38
    %p44 = scmp.eq.s32.totalorder %s11, 0
    %p45 = por %p43, %p44
    %p46 = scmp.ne.s32.totalorder %s35, %s38
    %p47 = scmp.eq.s32.totalorder %s16, 7
    %p48 = por %p46, %p47
    %p49 = scmp.ne.s32.totalorder %s38, %s39
    %p50 = scmp.eq.s32.totalorder %s16, 0
    %p51 = por %p49, %p50
    %p52 = scmp.ne.s32.totalorder %s38, %s39
    %p53 = scmp.eq.s32.totalorder %s17, 7
    %p54 = por %p52, %p53
    %p56 = scmp.ne.s32.totalorder %s39, %s55
    %p57 = scmp.eq.s32.totalorder %s17, 0
    %p58 = por %p56, %p57
    %s60 = sadd.s32 %s59, 1
    %p63 = scmp.eq.s32.totalorder %s11, 7
    %p64 = scmp.ne.s32.totalorder %s59, %s61
    %p65 = scmp.eq.s32.totalorder %s11, 0
    %p66 = por %p64, %p65
    %p67 = scmp.ne.s32.totalorder %s59, %s61
    %p68 = scmp.eq.s32.totalorder %s16, 7
    %p69 = por %p67, %p68
    %p70 = scmp.ne.s32.totalorder %s61, %s62
    %p71 = scmp.eq.s32.totalorder %s16, 0
    %p72 = por %p70, %p71
    %p73 = scmp.ne.s32.totalorder %s61, %s62
    %p74 = scmp.eq.s32.totalorder %s17, 7
    %p75 = por %p73, %p74
    %p77 = scmp.ne.s32.totalorder %s62, %s76
    %p78 = scmp.eq.s32.totalorder %s17, 0
    %p79 = por %p77, %p78
    %s80 = ssub.s32 %s18, %s30
    %s81 = ssub.s32 %s19, %s26
    %s82 = sor.u32 %s80, %s81
    %p83 = scmp.eq.s32.totalorder %s82, 0
    %s85 = sadd.s32 %s84, 1
    %s86 = scalar_select %p83, %s84, %s85
    %p89 = pneg %p83
    %p90 = scmp.eq.s32.totalorder %s11, 7
    %p91 = por %p89, %p90
    %p92 = scmp.ne.s32.totalorder %s84, %s87
    %p93 = scmp.eq.s32.totalorder %s11, 0
    %p94 = por %p92, %p93
    %p95 = scmp.ne.s32.totalorder %s84, %s87
    %p96 = scmp.eq.s32.totalorder %s16, 7
    %p97 = por %p95, %p96
    %p98 = scmp.ne.s32.totalorder %s87, %s88
    %p99 = scmp.eq.s32.totalorder %s16, 0
    %p100 = por %p98, %p99
    %p101 = scmp.ne.s32.totalorder %s87, %s88
    %p102 = scmp.eq.s32.totalorder %s17, 7
    %p103 = por %p101, %p102
    %p105 = scmp.ne.s32.totalorder %s88, %s104
    %p106 = scmp.eq.s32.totalorder %s17, 0
    %p107 = por %p105, %p106
    %s108 = ssub.s32 %s18, %s30
    %s109 = ssub.s32 %s19, %s26
    %s110 = sor.u32 %s108, %s109
    %p111 = scmp.eq.s32.totalorder %s110, 0
    %s113 = sadd.s32 %s112, 1
    %s114 = scalar_select %p111, %s112, %s113
    %p117 = pneg %p111
    %p118 = scmp.eq.s32.totalorder %s11, 7
    %p119 = por %p117, %p118
    %p120 = scmp.ne.s32.totalorder %s112, %s115
    %p121 = scmp.eq.s32.totalorder %s11, 0
    %p122 = por %p120, %p121
    %p123 = scmp.ne.s32.totalorder %s112, %s115
    %p124 = scmp.eq.s32.totalorder %s16, 7
    %p125 = por %p123, %p124
    %p126 = scmp.ne.s32.totalorder %s115, %s116
    %p127 = scmp.eq.s32.totalorder %s16, 0
    %p128 = por %p126, %p127
    %p129 = scmp.ne.s32.totalorder %s115, %s116
    %p130 = scmp.eq.s32.totalorder %s17, 7
    %p131 = por %p129, %p130
    %p133 = scmp.ne.s32.totalorder %s116, %s132
    %p134 = scmp.eq.s32.totalorder %s17, 0
    %p135 = por %p133, %p134
    %s136 = ssub.s32 %s18, %s30
    %s137 = ssub.s32 %s19, %s26
    %s138 = sor.u32 %s136, %s137
    %p139 = scmp.eq.s32.totalorder %s138, 0
    %s141 = sadd.s32 %s140, 1
    %s142 = scalar_select %p139, %s140, %s141
    %p145 = pneg %p139
    %p146 = scmp.eq.s32.totalorder %s11, 7
    %p147 = por %p145, %p146
    %p148 = scmp.ne.s32.totalorder %s140, %s143
    %p149 = scmp.eq.s32.totalorder %s11, 0
    %p150 = por %p148, %p149
    %p151 = scmp.ne.s32.totalorder %s140, %s143
    %p152 = scmp.eq.s32.totalorder %s16, 7
    %p153 = por %p151, %p152
    %p154 = scmp.ne.s32.totalorder %s143, %s144
    %p155 = scmp.eq.s32.totalorder %s16, 0
    %p156 = por %p154, %p155
    %p157 = scmp.ne.s32.totalorder %s143, %s144
    %p158 = scmp.eq.s32.totalorder %s17, 7
    %p159 = por %p157, %p158
    %p161 = scmp.ne.s32.totalorder %s144, %s160
    %p162 = scmp.eq.s32.totalorder %s17, 0
    %p163 = por %p161, %p162
    %p164 = scmp.le.s32.totalorder 1, %s11
    %p165 = scmp.lt.s32.totalorder %s11, 9
    %p166 = pnand %p164, %p165
    %p167 = pneg %p166
    // Predicated region
    $region9: #{transition_forward.2} parent=5 // pred_check
      _
    $region10: #{transition_forward.2} parent=5 // pred_check_branch
      %169 = sbr.rel (%p166) target = $region12
    $region11: #{transition_forward.2} parent=5 // pred_region
      %s170 = ssub.s32 %s11, 1
      // Predicated region
      $region13: #{transition_forward.2} parent=11 // pred_check
        %p171 = pneg %p72
      $region14: #{transition_forward.2} parent=11 // pred_check_branch
        %173 = sbr.rel (%p171) target = $region16
      $region15: #{transition_forward.2} parent=11 // pred_region
        _
      $region16: #{transition_forward.2} parent=11 // pred_fallthru
        _
    $region12: #{transition_forward.2} parent=5 // pred_fallthru
      _
    %p174 = scmp.lt.s32.totalorder %s11, 8
    // Predicated region
    $region17: #{transition_forward.2} parent=5 // pred_check
      %p175 = pneg %p174
    $region18: #{transition_forward.2} parent=5 // pred_check_branch
      %177 = sbr.rel (%p175) target = $region20
    $region19: #{transition_forward.2} parent=5 // pred_region
      // Predicated region
      $region21: #{transition_forward.2} parent=19 // pred_check
        %p178 = pneg %p45
      $region22: #{transition_forward.2} parent=19 // pred_check_branch
        %180 = sbr.rel (%p178) target = $region24
      $region23: #{transition_forward.2} parent=19 // pred_region
        %p181 = scmp.lt.s32.totalorder %s18, 1
        %s182 = scalar_select %p181, %s18, 1
        %p183 = scmp.lt.s32.totalorder %s19, 3
        %s184 = scalar_select %p183, %s19, 3
        %s185 = smul.addr %s182, 4
        %s186 = sadd.s32 %s184, %s185
        %s187 = smul.addr %s186, 8
        %s188 = scalar_lea.vmem %s0, %s187
      $region24: #{transition_forward.2} parent=19 // pred_fallthru
        _
    $region20: #{transition_forward.2} parent=5 // pred_fallthru
      _
    %p189 = scmp.le.s32.totalorder 1, %s11
    %p190 = scmp.lt.s32.totalorder %s11, 9
    %p191 = pnand %p189, %p190
    %p192 = pneg %p191
    // Predicated region
    $region25: #{transition_forward.2} parent=5 // pred_check
      _
    $region26: #{transition_forward.2} parent=5 // pred_check_branch
      %194 = sbr.rel (%p191) target = $region28
    $region27: #{transition_forward.2} parent=5 // pred_region
      %s195 = ssub.s32 %s11, 1
      %p196 = scmp.lt.s32.totalorder %s20, 1
      %s197 = scalar_select %p196, %s20, 1
      %p198 = scmp.lt.s32.totalorder %s21, 3
      %s199 = scalar_select %p198, %s21, 3
      %s200 = smul.addr %s197, 4
      %s201 = sadd.s32 %s199, %s200
      %s202 = smul.addr %s201, 8
      %s203 = scalar_lea.vmem %s0, %s202
      %p204 = pneg %p51
      %p205 = pneg %p48
      %p206 = pneg %p72
      %p207 = pneg %p69
      %p208 = pneg %p100
      %p209 = pneg %p97
      %p210 = scmp.lt.s32.totalorder %s20, 1
      %s211 = scalar_select %p210, %s20, 1
      %p212 = scmp.lt.s32.totalorder %s21, 3
      %s213 = scalar_select %p212, %s21, 3
      %s214 = smul.addr %s211, 4
      %s215 = sadd.s32 %s213, %s214
      %s216 = smul.addr %s215, 4
      %s217 = scalar_lea.vmem %s2, %s216
      %p218 = pneg %p128
      %p219 = pneg %p125
      %p220 = scmp.lt.s32.totalorder %s20, 1
      %s221 = scalar_select %p220, %s20, 1
      %p222 = scmp.lt.s32.totalorder %s21, 3
      %s223 = scalar_select %p222, %s21, 3
      %s224 = smul.addr %s221, 4
      %s225 = sadd.s32 %s223, %s224
      %s226 = smul.addr %s225, 8
      %s227 = scalar_lea.vmem %s3, %s226
      %p228 = pneg %p156
      %p229 = pneg %p153
      %p230 = scmp.lt.s32.totalorder %s20, 1
      %s231 = scalar_select %p230, %s20, 1
      %p232 = scmp.lt.s32.totalorder %s21, 3
      %s233 = scalar_select %p232, %s21, 3
      %s234 = smul.addr %s231, 4
      %s235 = sadd.s32 %s233, %s234
      %s236 = smul.addr %s235, 8
      %s237 = scalar_lea.vmem %s4, %s236
      %p238 = scmp.lt.s32.totalorder %s20, 1
      %s239 = scalar_select %p238, %s20, 1
      %p240 = scmp.lt.s32.totalorder %s21, 3
      %s241 = scalar_select %p240, %s21, 3
      %s242 = smul.addr %s239, 4
      %s243 = sadd.s32 %s241, %s242
      %s244 = smul.addr %s243, 8
      %s245 = scalar_lea.vmem %s0, %s244
      %p246 = scmp.lt.s32.totalorder %s20, 1
      %s247 = scalar_select %p246, %s20, 1
      %p248 = scmp.lt.s32.totalorder %s21, 3
      %s249 = scalar_select %p248, %s21, 3
      %s250 = smul.addr %s247, 4
      %s251 = sadd.s32 %s249, %s250
      %s252 = smul.addr %s251, 4
      %s253 = scalar_lea.vmem %s2, %s252
      %p254 = scmp.lt.s32.totalorder %s20, 1
      %s255 = scalar_select %p254, %s20, 1
      %p256 = scmp.lt.s32.totalorder %s21, 3
      %s257 = scalar_select %p256, %s21, 3
      %s258 = smul.addr %s255, 4
      %s259 = sadd.s32 %s257, %s258
      %s260 = smul.addr %s259, 8
      %s261 = scalar_lea.vmem %s3, %s260
      %p262 = scmp.lt.s32.totalorder %s20, 1
      %s263 = scalar_select %p262, %s20, 1
      %p264 = scmp.lt.s32.totalorder %s21, 3
      %s265 = scalar_select %p264, %s21, 3
      %s266 = smul.addr %s263, 4
      %s267 = sadd.s32 %s265, %s266
      %s268 = smul.addr %s267, 8
      %s269 = scalar_lea.vmem %s4, %s268
      %v271 = vld [vmem:[%s245] sm:$0xff]
      %v272 = vmul.f32 %v271, %v271
      %vm273 = vcmask 261120
      %v274 = vsel %vm273, %v272, 0.0
      %275 = vadd.xlane.f32.xlu0 %v274
      %v276 = vpop.xlane.xlu0 %275
      %vm277 = vcmask 7168
      %278 = vst.msk [vmem:[%s269] sm:$0xff] %vm277, %v276
      %v279 = vpack.c.bf16 %v271, %v271
      %v280 = vld [vmem:[%s1] sm:$0xf]
      %v281 = vld [vmem:[%s1 + $0x4] sm:$0xf]
      %v282 = vld [vmem:[%s1 + $0x8] sm:$0xf]
      %v283 = vld [vmem:[%s1 + $0xc] sm:$0xf]
      %v288 = vunpack.c.l.b16 %v280
      %v289 = vunpack.c.l.b16 %v281
      %v290 = vunpack.c.l.b16 %v282
      %v291 = vunpack.c.l.b16 %v283
      %v292 = vpack.c.b16 %v289, %v288
      %v293 = vpack.c.b16 %v291, %v290
      %v297 = vsel %vm273, %v279, 0
      %299 = vmatprep.subr.bf16.mxu0 0
      %300 = vmatpush1.bf16.msra.mxu0 0
      %301 = vmatprep.subr.bf16.mxu0 0
      %302 = vmatpush1.bf16.msra.mxu0 0
      %303 = vmatprep.subr.bf16.mxu0 0
      %304 = vmatpush1.bf16.msra.mxu0 0
      %305 = vmatprep.subr.bf16.mxu0 0
      %306 = vmatpush1.bf16.msra.mxu0 0
      %307 = vmatprep.subr.bf16.mxu0 0
      %308 = vmatpush1.bf16.msra.mxu0 0
      %309 = vmatprep.subr.bf16.mxu0 0
      %310 = vmatpush1.bf16.msra.mxu0 0
      %311 = vmatprep.subr.bf16.mxu0 0
      %312 = vmatpush1.bf16.msra.mxu0 %v293
      %313 = vmatprep.subr.bf16.mxu0 0
      %314 = vmatpush1.bf16.msra.mxu0 %v292
      %315 = vmatprep.subr.bf16.mxu0 0
      %316 = vmatpush2.bf16.msra.mxu0 0
      %317 = vmatprep.subr.bf16.mxu0 0
      %318 = vmatpush2.bf16.msra.mxu0 0
      %319 = vmatprep.subr.bf16.mxu0 0
      %320 = vmatpush2.bf16.msra.mxu0 0
      %321 = vmatprep.subr.bf16.mxu0 0
      %322 = vmatpush2.bf16.msra.mxu0 0
      %323 = vmatprep.subr.bf16.mxu0 0
      %324 = vmatpush2.bf16.msra.mxu0 0
      %325 = vmatprep.subr.bf16.mxu0 0
      %326 = vmatpush2.bf16.msra.mxu0 0
      %327 = vmatprep.subr.bf16.mxu0 0
      %328 = vmatpush2.bf16.msra.mxu0 0
      %329 = vmatprep.subr.bf16.mxu0 0
      %330 = vmatpush2.bf16.msra.mxu0 0
      %331 = vmatprep.mubr.bf16.mxu0 0
      %332 = vmatmul.mubr.bf16.gmra.mxu0 %v297
      %v333 = vpop.f32.mrf.mxu0
      %v334 = vadd.f32 0.0, %v333
      %v335 = vpop.f32.mrf.mxu0
      %v336 = vpop.f32.mrf.mxu0
      %v337 = vpop.f32.mrf.mxu0
      %338 = vdwg.mxu0
      %vm339 = vcmask 64512
      %v340 = vsel %vm339, %v334, 0.0
      %341 = vadd.xlane.f32.xlu0 %v340
      %v342 = vpop.xlane.xlu0 %341
      %343 = vst.msk [vmem:[%s261] sm:$0xff] %vm277, %v342
      %v344 = vpack.c.bf16 %v334, %v334
      %vm345 = vcmask 60416
      %346 = vst.msk [vmem:[%s253] sm:$0xf] %vm345, %v344
      %p347 = scmp.lt.s32.totalorder %s20, 1
      %s348 = scalar_select %p347, %s20, 1
      %p349 = scmp.lt.s32.totalorder %s21, 3
      %s350 = scalar_select %p349, %s21, 3
      %s351 = smul.addr %s348, 4
      %s352 = sadd.s32 %s350, %s351
      %s353 = smul.addr %s352, 4
      %s354 = scalar_lea.vmem %s2, %s353
      %p355 = scmp.lt.s32.totalorder %s20, 1
      %s356 = scalar_select %p355, %s20, 1
      %p357 = scmp.lt.s32.totalorder %s21, 3
      %s358 = scalar_select %p357, %s21, 3
      %s359 = smul.addr %s356, 4
      %s360 = sadd.s32 %s358, %s359
      %s361 = smul.addr %s360, 8
      %s362 = scalar_lea.vmem %s3, %s361
      %p363 = scmp.lt.s32.totalorder %s20, 1
      %s364 = scalar_select %p363, %s20, 1
      %p365 = scmp.lt.s32.totalorder %s21, 3
      %s366 = scalar_select %p365, %s21, 3
      %s367 = smul.addr %s364, 4
      %s368 = sadd.s32 %s366, %s367
      %s369 = smul.addr %s368, 8
      %s370 = scalar_lea.vmem %s4, %s369
      // Predicated region
      $region29: #{transition_forward.2} parent=27 // pred_check
        %p371 = pneg %p97
      $region30: #{transition_forward.2} parent=27 // pred_check_branch
        %373 = sbr.rel (%p371) target = $region32
      $region31: #{transition_forward.2} parent=27 // pred_region
        _
      $region32: #{transition_forward.2} parent=27 // pred_fallthru
        _
      // Predicated region
      $region33: #{transition_forward.2} parent=27 // pred_check
        %p374 = pneg %p125
      $region34: #{transition_forward.2} parent=27 // pred_check_branch
        %376 = sbr.rel (%p374) target = $region36
      $region35: #{transition_forward.2} parent=27 // pred_region
        _
      $region36: #{transition_forward.2} parent=27 // pred_fallthru
        _
      // Predicated region
      $region37: #{transition_forward.2} parent=27 // pred_check
        %p377 = pneg %p153
      $region38: #{transition_forward.2} parent=27 // pred_check_branch
        %379 = sbr.rel (%p377) target = $region40
      $region39: #{transition_forward.2} parent=27 // pred_region
        _
      $region40: #{transition_forward.2} parent=27 // pred_fallthru
        _
    $region28: #{transition_forward.2} parent=5 // pred_fallthru
      _
    %p380 = scmp.le.s32.totalorder 2, %s11
    // Predicated region
    $region41: #{transition_forward.2} parent=5 // pred_check
      %p381 = pneg %p380
    $region42: #{transition_forward.2} parent=5 // pred_check_branch
      %383 = sbr.rel (%p381) target = $region44
    $region43: #{transition_forward.2} parent=5 // pred_region
      %s384 = ssub.s32 %s11, 2
      // Predicated region
      $region45: #{transition_forward.2} parent=43 // pred_check
        %p385 = pneg %p103
      $region46: #{transition_forward.2} parent=43 // pred_check_branch
        %387 = sbr.rel (%p385) target = $region48
      $region47: #{transition_forward.2} parent=43 // pred_region
        %p388 = scmp.lt.s32.totalorder %s22, 1
        %s389 = scalar_select %p388, %s22, 1
        %p390 = scmp.lt.s32.totalorder %s23, 3
        %s391 = scalar_select %p390, %s23, 3
        %s392 = smul.addr %s389, 4
        %s393 = sadd.s32 %s391, %s392
        %s394 = smul.addr %s393, 4
        %s395 = scalar_lea.vmem %s2, %s394
      $region48: #{transition_forward.2} parent=43 // pred_fallthru
        _
      // Predicated region
      $region49: #{transition_forward.2} parent=43 // pred_check
        %p396 = pneg %p131
      $region50: #{transition_forward.2} parent=43 // pred_check_branch
        %398 = sbr.rel (%p396) target = $region52
      $region51: #{transition_forward.2} parent=43 // pred_region
        %p399 = scmp.lt.s32.totalorder %s22, 1
        %s400 = scalar_select %p399, %s22, 1
        %p401 = scmp.lt.s32.totalorder %s23, 3
        %s402 = scalar_select %p401, %s23, 3
        %s403 = smul.addr %s400, 4
        %s404 = sadd.s32 %s402, %s403
        %s405 = smul.addr %s404, 8
        %s406 = scalar_lea.vmem %s3, %s405
      $region52: #{transition_forward.2} parent=43 // pred_fallthru
        _
      // Predicated region
      $region53: #{transition_forward.2} parent=43 // pred_check
        %p407 = pneg %p159
      $region54: #{transition_forward.2} parent=43 // pred_check_branch
        %409 = sbr.rel (%p407) target = $region56
      $region55: #{transition_forward.2} parent=43 // pred_region
        %p410 = scmp.lt.s32.totalorder %s22, 1
        %s411 = scalar_select %p410, %s22, 1
        %p412 = scmp.lt.s32.totalorder %s23, 3
        %s413 = scalar_select %p412, %s23, 3
        %s414 = smul.addr %s411, 4
        %s415 = sadd.s32 %s413, %s414
        %s416 = smul.addr %s415, 8
        %s417 = scalar_lea.vmem %s4, %s416
      $region56: #{transition_forward.2} parent=43 // pred_fallthru
        _
    $region44: #{transition_forward.2} parent=5 // pred_fallthru
      _
  $region6: #{transition_forward.2} parent=0 // loop_footer
    %s15 = sadd.s32 1, %s11
  $region7: #{transition_forward.2} parent=0 // loop_footer_branch
    %10 = sbr.rel target = $region3
  $region8: #{transition_forward.2} parent=0 // loop_exit
    _

// kernel: transition_forward.3
$region0: #{transition_forward.3}
  #allocation0 [shape = 'u32[]', space=smem, size = 0x4, offset = 0x4, fixed_abs, tag = 'smem constant byte address 0x4 - core index']
  #allocation1 [shape = 'u32[144,128]{1,0:T(1,128)}', space=vmem, size = 0x12000, scoped, tag = 'internal scratch']
  %s0 = inlined_call_operand.vmem [shape: bf16[2,4,64], index: 0, kind: input, shape index: {}]
  %s1 = inlined_call_operand.vmem [shape: bf16[8,4], index: 1, kind: input, shape index: {}]
  %s2 = inlined_call_operand.vmem [shape: f32[8,1], index: 2, kind: input, shape index: {}]
  %s3 = inlined_call_operand.vmem [shape: f32[2,8,64], index: 3, kind: output, shape index: {}]
  %s4 = sld [smem:[#allocation0]]
  $region45: #{transition_forward.3} parent=0
    _
  %s6 = ssub.s32 1, %s4
  %s7 = scalar_select 0, %s6, %s4
  loop: start=0, step=1, limit=4
  $region2: #{transition_forward.3} parent=0 // loop_pre_header
    _
  $region3: #{transition_forward.3} parent=0 // loop_header
    %s9 = sphi 0, %s13
    %p10 = scmp.ge.s32.totalorder %s9, 4
    %s16 = sphi 0, %s28
    %s17 = sphi 0, %s24
    %s18 = sphi 0, %s16
    %s19 = sphi 0, %s17
    %s20 = sphi 0, %s18
    %s21 = sphi 0, %s19
    %s33 = sphi 0, %s35
    %s36 = sphi 0, %s33
    %s37 = sphi 0, %s36
    %s53 = sphi 0, %s37
    %s57 = sphi 0, %s57
    %s59 = sphi 0, %s57
    %s60 = sphi 0, %s59
    %s74 = sphi 0, %s60
    %s78 = sphi 0, %s78
    %s80 = sphi 0, %s78
    %s81 = sphi 0, %s80
    %s95 = sphi 0, %s81
    %s103 = sphi 0, %s105
    %s106 = sphi 0, %s103
    %s107 = sphi 0, %s106
    %s123 = sphi 0, %s107
  $region4: #{transition_forward.3} parent=0 // loop_header_branch
    %12 = sbr.rel (%p10) target = $region8
  $region5: #{transition_forward.3} parent=0 // loop_body
    %s14 = ssub.s32 %s9, 1
    %s15 = ssub.s32 %s9, 2
    %s22 = sadd.s32 1, %s17
    %p23 = scmp.ge.s32.totalorder %s22, 1
    %s24 = scalar_select %p23, 0, %s22
    %s25 = sadd.s32 1, %s16
    %s26 = scalar_select %p23, %s25, %s16
    %p27 = scmp.ge.s32.totalorder %s26, 2
    %s28 = scalar_select %p27, 0, %s26
    %s29 = ssub.s32 %s16, %s28
    %s30 = ssub.s32 %s17, %s24
    %s31 = sor.u32 %s29, %s30
    %p32 = scmp.eq.s32.totalorder %s31, 0
    %s34 = sadd.s32 %s33, 1
    %s35 = scalar_select %p32, %s33, %s34
    %p38 = pneg %p32
    %p39 = scmp.eq.s32.totalorder %s9, 1
    %p40 = por %p38, %p39
    %p41 = scmp.ne.s32.totalorder %s33, %s36
    %p42 = scmp.eq.s32.totalorder %s9, 0
    %p43 = por %p41, %p42
    %p44 = scmp.ne.s32.totalorder %s33, %s36
    %p45 = scmp.eq.s32.totalorder %s14, 1
    %p46 = por %p44, %p45
    %p47 = scmp.ne.s32.totalorder %s36, %s37
    %p48 = scmp.eq.s32.totalorder %s14, 0
    %p49 = por %p47, %p48
    %p50 = scmp.ne.s32.totalorder %s36, %s37
    %p51 = scmp.eq.s32.totalorder %s15, 1
    %p52 = por %p50, %p51
    %p54 = scmp.ne.s32.totalorder %s37, %s53
    %p55 = scmp.eq.s32.totalorder %s15, 0
    %p56 = por %p54, %p55
    %s58 = sadd.s32 %s57, 1
    %p61 = scmp.eq.s32.totalorder %s9, 1
    %p62 = scmp.ne.s32.totalorder %s57, %s59
    %p63 = scmp.eq.s32.totalorder %s9, 0
    %p64 = por %p62, %p63
    %p65 = scmp.ne.s32.totalorder %s57, %s59
    %p66 = scmp.eq.s32.totalorder %s14, 1
    %p67 = por %p65, %p66
    %p68 = scmp.ne.s32.totalorder %s59, %s60
    %p69 = scmp.eq.s32.totalorder %s14, 0
    %p70 = por %p68, %p69
    %p71 = scmp.ne.s32.totalorder %s59, %s60
    %p72 = scmp.eq.s32.totalorder %s15, 1
    %p73 = por %p71, %p72
    %p75 = scmp.ne.s32.totalorder %s60, %s74
    %p76 = scmp.eq.s32.totalorder %s15, 0
    %p77 = por %p75, %p76
    %s79 = sadd.s32 %s78, 1
    %p82 = scmp.eq.s32.totalorder %s9, 1
    %p83 = scmp.ne.s32.totalorder %s78, %s80
    %p84 = scmp.eq.s32.totalorder %s9, 0
    %p85 = por %p83, %p84
    %p86 = scmp.ne.s32.totalorder %s78, %s80
    %p87 = scmp.eq.s32.totalorder %s14, 1
    %p88 = por %p86, %p87
    %p89 = scmp.ne.s32.totalorder %s80, %s81
    %p90 = scmp.eq.s32.totalorder %s14, 0
    %p91 = por %p89, %p90
    %p92 = scmp.ne.s32.totalorder %s80, %s81
    %p93 = scmp.eq.s32.totalorder %s15, 1
    %p94 = por %p92, %p93
    %p96 = scmp.ne.s32.totalorder %s81, %s95
    %p97 = scmp.eq.s32.totalorder %s15, 0
    %p98 = por %p96, %p97
    %s99 = ssub.s32 %s16, %s28
    %s100 = ssub.s32 %s17, %s24
    %s101 = sor.u32 %s99, %s100
    %p102 = scmp.eq.s32.totalorder %s101, 0
    %s104 = sadd.s32 %s103, 1
    %s105 = scalar_select %p102, %s103, %s104
    %p108 = pneg %p102
    %p109 = scmp.eq.s32.totalorder %s9, 1
    %p110 = por %p108, %p109
    %p111 = scmp.ne.s32.totalorder %s103, %s106
    %p112 = scmp.eq.s32.totalorder %s9, 0
    %p113 = por %p111, %p112
    %p114 = scmp.ne.s32.totalorder %s103, %s106
    %p115 = scmp.eq.s32.totalorder %s14, 1
    %p116 = por %p114, %p115
    %p117 = scmp.ne.s32.totalorder %s106, %s107
    %p118 = scmp.eq.s32.totalorder %s14, 0
    %p119 = por %p117, %p118
    %p120 = scmp.ne.s32.totalorder %s106, %s107
    %p121 = scmp.eq.s32.totalorder %s15, 1
    %p122 = por %p120, %p121
    %p124 = scmp.ne.s32.totalorder %s107, %s123
    %p125 = scmp.eq.s32.totalorder %s15, 0
    %p126 = por %p124, %p125
    %p127 = scmp.le.s32.totalorder 1, %s9
    %p128 = scmp.lt.s32.totalorder %s9, 3
    %p129 = pnand %p127, %p128
    %p130 = pneg %p129
    // Predicated region
    $region9: #{transition_forward.3} parent=5 // pred_check
      _
    $region10: #{transition_forward.3} parent=5 // pred_check_branch
      %132 = sbr.rel (%p129) target = $region12
    $region11: #{transition_forward.3} parent=5 // pred_region
      %s133 = ssub.s32 %s9, 1
      // Predicated region
      $region13: #{transition_forward.3} parent=11 // pred_check
        %p134 = pneg %p70
      $region14: #{transition_forward.3} parent=11 // pred_check_branch
        %136 = sbr.rel (%p134) target = $region16
      $region15: #{transition_forward.3} parent=11 // pred_region
        _
      $region16: #{transition_forward.3} parent=11 // pred_fallthru
        _
      // Predicated region
      $region17: #{transition_forward.3} parent=11 // pred_check
        %p137 = pneg %p91
      $region18: #{transition_forward.3} parent=11 // pred_check_branch
        %139 = sbr.rel (%p137) target = $region20
      $region19: #{transition_forward.3} parent=11 // pred_region
        _
      $region20: #{transition_forward.3} parent=11 // pred_fallthru
        _
    $region12: #{transition_forward.3} parent=5 // pred_fallthru
      _
    %p140 = scmp.lt.s32.totalorder %s9, 2
    // Predicated region
    $region21: #{transition_forward.3} parent=5 // pred_check
      %p141 = pneg %p140
    $region22: #{transition_forward.3} parent=5 // pred_check_branch
      %143 = sbr.rel (%p141) target = $region24
    $region23: #{transition_forward.3} parent=5 // pred_region
      // Predicated region
      $region25: #{transition_forward.3} parent=23 // pred_check
        %p144 = pneg %p43
      $region26: #{transition_forward.3} parent=23 // pred_check_branch
        %146 = sbr.rel (%p144) target = $region28
      $region27: #{transition_forward.3} parent=23 // pred_region
        %p147 = scmp.lt.s32.totalorder %s16, 1
        %s148 = scalar_select %p147, %s16, 1
        %p149 = scmp.lt.s32.totalorder %s17, 0
        %s150 = scalar_select %p149, %s17, 0
        %s151 = sadd.s32 %s150, %s148
        %s152 = smul.addr %s151, 2
        %s153 = scalar_lea.vmem %s0, %s152
      $region28: #{transition_forward.3} parent=23 // pred_fallthru
        _
    $region24: #{transition_forward.3} parent=5 // pred_fallthru
      _
    %p154 = scmp.le.s32.totalorder 1, %s9
    %p155 = scmp.lt.s32.totalorder %s9, 3
    %p156 = pnand %p154, %p155
    %p157 = pneg %p156
    // Predicated region
    $region29: #{transition_forward.3} parent=5 // pred_check
      _
    $region30: #{transition_forward.3} parent=5 // pred_check_branch
      %159 = sbr.rel (%p156) target = $region32
    $region31: #{transition_forward.3} parent=5 // pred_region
      %s160 = ssub.s32 %s9, 1
      %p161 = scmp.lt.s32.totalorder %s18, 1
      %s162 = scalar_select %p161, %s18, 1
      %p163 = scmp.lt.s32.totalorder %s19, 0
      %s164 = scalar_select %p163, %s19, 0
      %s165 = sadd.s32 %s164, %s162
      %s166 = smul.addr %s165, 2
      %s167 = scalar_lea.vmem %s0, %s166
      %p168 = pneg %p49
      %p169 = pneg %p46
      %p170 = pneg %p70
      %p171 = pneg %p67
      %p172 = pneg %p91
      %p173 = pneg %p88
      %p174 = pneg %p119
      %p175 = pneg %p116
      %p176 = scmp.lt.s32.totalorder %s18, 1
      %s177 = scalar_select %p176, %s18, 1
      %p178 = scmp.lt.s32.totalorder %s19, 0
      %s179 = scalar_select %p178, %s19, 0
      %s180 = sadd.s32 %s179, %s177
      %s181 = smul.addr %s180, 8
      %s182 = scalar_lea.vmem %s3, %s181
      %p183 = scmp.lt.s32.totalorder %s18, 1
      %s184 = scalar_select %p183, %s18, 1
      %p185 = scmp.lt.s32.totalorder %s19, 0
      %s186 = scalar_select %p185, %s19, 0
      %s187 = sadd.s32 %s186, %s184
      %s188 = smul.addr %s187, 2
      %s189 = scalar_lea.vmem %s0, %s188
      %p190 = scmp.lt.s32.totalorder %s18, 1
      %s191 = scalar_select %p190, %s18, 1
      %p192 = scmp.lt.s32.totalorder %s19, 0
      %s193 = scalar_select %p192, %s19, 0
      %s194 = sadd.s32 %s193, %s191
      %s195 = smul.addr %s194, 8
      %s196 = scalar_lea.vmem %s3, %s195
      %v198 = vld [vmem:[%s1] sm:$0xf]
      %v199 = vld [vmem:[%s189] sm:$0x3]
      %v200 = vld [vmem:[%s2] sm:$0xff]
      %202 = vset.pattern.permute.xlu0 0
      %203 = vperm.xlu0 %202, %v200
      %v204 = vpop.permute.xlu0 %203
      %vm206 = vcmask 31744
      %v208 = vsel %vm206, %v198, 0
      %vm210 = vcmask 1041408
      %v212 = vsel %vm210, %v199, 0
      %214 = vmatprep.subr.bf16.mxu0 0
      %215 = vmatpush1.bf16.msra.mxu0 0
      %216 = vmatprep.subr.bf16.mxu0 0
      %217 = vmatpush1.bf16.msra.mxu0 0
      %218 = vmatprep.subr.bf16.mxu0 0
      %219 = vmatpush1.bf16.msra.mxu0 0
      %220 = vmatprep.subr.bf16.mxu0 0
      %221 = vmatpush1.bf16.msra.mxu0 0
      %222 = vmatprep.subr.bf16.mxu0 0
      %223 = vmatpush1.bf16.msra.mxu0 0
      %224 = vmatprep.subr.bf16.mxu0 0
      %225 = vmatpush1.bf16.msra.mxu0 0
      %226 = vmatprep.subr.bf16.mxu0 0
      %227 = vmatpush1.bf16.msra.mxu0 0
      %228 = vmatprep.subr.bf16.mxu0 0
      %229 = vmatpush1.bf16.msra.mxu0 %v212
      %230 = vmatprep.subr.bf16.mxu0 0
      %231 = vmatpush2.bf16.msra.mxu0 0
      %232 = vmatprep.subr.bf16.mxu0 0
      %233 = vmatpush2.bf16.msra.mxu0 0
      %234 = vmatprep.subr.bf16.mxu0 0
      %235 = vmatpush2.bf16.msra.mxu0 0
      %236 = vmatprep.subr.bf16.mxu0 0
      %237 = vmatpush2.bf16.msra.mxu0 0
      %238 = vmatprep.subr.bf16.mxu0 0
      %239 = vmatpush2.bf16.msra.mxu0 0
      %240 = vmatprep.subr.bf16.mxu0 0
      %241 = vmatpush2.bf16.msra.mxu0 0
      %242 = vmatprep.subr.bf16.mxu0 0
      %243 = vmatpush2.bf16.msra.mxu0 0
      %244 = vmatprep.subr.bf16.mxu0 0
      %245 = vmatpush2.bf16.msra.mxu0 0
      %246 = vmatprep.mubr.bf16.mxu0 0
      %247 = vmatmul.mubr.bf16.gmra.mxu0 %v208
      %v248 = vpop.f32.mrf.mxu0
      %v249 = vadd.f32 %v204, %v248
      %v250 = vpop.f32.mrf.mxu0
      %v251 = vpop.f32.mrf.mxu0
      %v252 = vpop.f32.mrf.mxu0
      %253 = vdwg.mxu0
      %vm254 = vcmask 523264
      %255 = vst.msk [vmem:[%s196] sm:$0xff] %vm254, %v249
      %p256 = scmp.lt.s32.totalorder %s18, 1
      %s257 = scalar_select %p256, %s18, 1
      %p258 = scmp.lt.s32.totalorder %s19, 0
      %s259 = scalar_select %p258, %s19, 0
      %s260 = sadd.s32 %s259, %s257
      %s261 = smul.addr %s260, 8
      %s262 = scalar_lea.vmem %s3, %s261
      // Predicated region
      $region33: #{transition_forward.3} parent=31 // pred_check
        %p263 = pneg %p116
      $region34: #{transition_forward.3} parent=31 // pred_check_branch
        %265 = sbr.rel (%p263) target = $region36
      $region35: #{transition_forward.3} parent=31 // pred_region
        _
      $region36: #{transition_forward.3} parent=31 // pred_fallthru
        _
    $region32: #{transition_forward.3} parent=5 // pred_fallthru
      _
    %p266 = scmp.le.s32.totalorder 2, %s9
    // Predicated region
    $region37: #{transition_forward.3} parent=5 // pred_check
      %p267 = pneg %p266
    $region38: #{transition_forward.3} parent=5 // pred_check_branch
      %269 = sbr.rel (%p267) target = $region40
    $region39: #{transition_forward.3} parent=5 // pred_region
      %s270 = ssub.s32 %s9, 2
      // Predicated region
      $region41: #{transition_forward.3} parent=39 // pred_check
        %p271 = pneg %p122
      $region42: #{transition_forward.3} parent=39 // pred_check_branch
        %273 = sbr.rel (%p271) target = $region44
      $region43: #{transition_forward.3} parent=39 // pred_region
        %p274 = scmp.lt.s32.totalorder %s20, 1
        %s275 = scalar_select %p274, %s20, 1
        %p276 = scmp.lt.s32.totalorder %s21, 0
        %s277 = scalar_select %p276, %s21, 0
        %s278 = sadd.s32 %s277, %s275
        %s279 = smul.addr %s278, 8
        %s280 = scalar_lea.vmem %s3, %s279
      $region44: #{transition_forward.3} parent=39 // pred_fallthru
        _
    $region40: #{transition_forward.3} parent=5 // pred_fallthru
      _
  $region6: #{transition_forward.3} parent=0 // loop_footer
    %s13 = sadd.s32 1, %s9
  $region7: #{transition_forward.3} parent=0 // loop_footer_branch
    %8 = sbr.rel target = $region3
  $region8: #{transition_forward.3} parent=0 // loop_exit
    _

</llo_original>
